<compile_context>
chip_gen: v6e
topology: v6e:2x2x1
jax: 0.10.0
libtpu: 0.0.40
codegen_flags: <defaults>
</compile_context>

<pallas_src>
import jax
import jax.numpy as jnp
from jax.experimental import pallas as pl
from jax.experimental.pallas import tpu as pltpu


def _round_up(x: int, m: int) -> int:
    return ((x + m - 1) // m) * m


def _sublane_multiple(itemsize: int) -> int:
    # f32 -> 8 sublanes per vreg, bf16 -> 16, int8/fp8 -> 32.
    return 8 * max(1, 4 // itemsize)


def _pick_time_tile(T: int, c_pad: int, d_pad: int, itemsize: int,
                    vmem_budget_bytes: int) -> int:
    """Largest lane-dense time tile that fits the VMEM budget without
    excessive time padding. Always returns a multiple of 128."""
    t128 = _round_up(T, 128)
    for cand in (1024, 512, 256):
        if cand > t128:
            continue
        t_pad = _round_up(T, cand)
        if t_pad > t128 + t128 // 4:          # cap time-padding waste at ~25%
            continue
        # double-buffered x + out tiles, double-buffered subject weight + f32 bias
        need = (2 * (c_pad + d_pad) * cand * itemsize
                + 2 * d_pad * (c_pad * itemsize + 4))
        if need <= vmem_budget_bytes:
            return cand
    return 128


def _subject_block_kernel(order_ref, sidx_ref, x_ref, wc_ref, bc_ref, o_ref):
    # order/sidx are consumed only by the index_maps (subject gather + grouping).
    del order_ref, sidx_ref
    z = jnp.dot(wc_ref[0], x_ref[0], preferred_element_type=jnp.float32)
    z = z + bc_ref[0]                          # (D, 1) f32 bias, broadcast over lanes
    o_ref[0] = z.astype(o_ref.dtype)


def subject_block_forward(x, subject_idxs, *, w_raw, b_raw, w, b, ws, num_channels):
    """JAX/Pallas equivalent of SubjectBlock.forward(X, subject_idxs).

    x:            (B, C_in, T)
    subject_idxs: (B,) int
    w_raw/b_raw:  (D1, num_channels) / (D1,)   -- conv_raw weights
    w/b:          (D1, D1) / (D1,)             -- conv weights
    ws:           (num_subjects, D1, D1)       -- per-subject weights (no bias)
    """
    B, C_in, T = x.shape
    S, D1, _ = ws.shape

    # Static, shape-based branch, same as the torch module.
    if C_in == num_channels:
        w1, b1 = w_raw, b_raw
    else:
        if C_in != D1:
            raise ValueError(
                f"SubjectBlock: input has {C_in} channels; expected "
                f"{num_channels} (raw path) or {D1} (projected path).")
        w1, b1 = w, b

    compute_dtype = x.dtype

    # Fuse both 1x1 convs:  Ws @ (W1 @ x + b1) == (Ws @ W1) @ x + (Ws @ b1).
    w_comb = jnp.einsum("sod,dc->soc", ws, w1,
                        preferred_element_type=jnp.float32).astype(compute_dtype)
    b_comb = jnp.einsum("sod,d->so", ws, b1,
                        preferred_element_type=jnp.float32)      # bias kept in f32

    # Pad channel dims to sublane multiples; pad time to a multiple of the tile.
    itemsize = jnp.dtype(compute_dtype).itemsize
    sub = _sublane_multiple(itemsize)
    c_pad = _round_up(C_in, sub)
    d_pad = _round_up(D1, sub)
    tile_t = _pick_time_tile(T, c_pad, d_pad, itemsize, vmem_budget_bytes=24 << 20)
    t_pad = _round_up(T, tile_t)

    if (c_pad, t_pad) != (C_in, T):
        x = jnp.pad(x, ((0, 0), (0, c_pad - C_in), (0, t_pad - T)))
    if (d_pad, c_pad) != (D1, C_in):
        w_comb = jnp.pad(w_comb, ((0, 0), (0, d_pad - D1), (0, c_pad - C_in)))
    if d_pad != D1:
        b_comb = jnp.pad(b_comb, ((0, 0), (0, d_pad - D1)))
    b_comb = b_comb.reshape(S, d_pad, 1)

    # Walk the batch grid in subject-sorted order (pure index indirection, no
    # data movement) so consecutive batch rows hit the same subject-weight
    # block and its DMA is elided.
    subject_idxs = subject_idxs.astype(jnp.int32)
    order = jnp.argsort(subject_idxs).astype(jnp.int32)          # (B,)
    sidx_sorted = jnp.take(subject_idxs, order)                  # (B,)

    grid = (B, t_pad // tile_t)

    grid_spec = pltpu.PrefetchScalarGridSpec(
        num_scalar_prefetch=2,
        grid=grid,
        in_specs=[
            # x: one (permuted) batch row, full channel axis, lane-dense time tile.
            pl.BlockSpec((1, c_pad, tile_t),
                         lambda bi, ti, order, sidx: (order[bi], 0, ti)),
            # fused per-subject weight, gathered by scalar-prefetched index.
            pl.BlockSpec((1, d_pad, c_pad),
                         lambda bi, ti, order, sidx: (sidx[bi], 0, 0)),
            # fused per-subject bias (f32 column).
            pl.BlockSpec((1, d_pad, 1),
                         lambda bi, ti, order, sidx: (sidx[bi], 0, 0)),
        ],
        out_specs=pl.BlockSpec((1, d_pad, tile_t),
                               lambda bi, ti, order, sidx: (order[bi], 0, ti)),
    )

    out = pl.pallas_call(
        _subject_block_kernel,
        out_shape=jax.ShapeDtypeStruct((B, d_pad, t_pad), compute_dtype),
        grid_spec=grid_spec,
        compiler_params=pltpu.CompilerParams(
            dimension_semantics=("parallel", "parallel"),
            vmem_limit_bytes=32 * 1024 * 1024,
        ),
    )(order, sidx_sorted, x, w_comb, b_comb)

    return out[:, :D1, :T]


def _subject_block_ref(x, subject_idxs, *, w_raw, b_raw, w, b, ws, num_channels):
    """Pure-JAX reference (mirrors the torch forward)."""
    if x.shape[1] == num_channels:
        w1, b1 = w_raw, b_raw
    else:
        w1, b1 = w, b
    y = jnp.einsum("oc,bct->bot", w1, x) + b1[None, :, None]
    w_sel = ws[subject_idxs]                                     # (B, D1, D1)
    return jnp.einsum("bod,bdt->bot", w_sel, y)


if __name__ == "__main__":
    key = jax.random.PRNGKey(0)
    B, C, D1, T, S = 2, 4, 8, 16, 3          # small shapes: (batch, channels, time)
    k1, k2, k3, k4, k5, k6, k7, k8 = jax.random.split(key, 8)

    x = jax.random.normal(k1, (B, C, T), dtype=jnp.float32)
    w_raw = 0.1 * jax.random.normal(k2, (D1, C), dtype=jnp.float32)
    b_raw = 0.1 * jax.random.normal(k3, (D1,), dtype=jnp.float32)
    w = 0.1 * jax.random.normal(k4, (D1, D1), dtype=jnp.float32)
    b = 0.1 * jax.random.normal(k5, (D1,), dtype=jnp.float32)
    ws = 0.1 * jax.random.normal(k6, (S, D1, D1), dtype=jnp.float32)
    subject_idxs = jnp.array([2, 0], dtype=jnp.int32)

    params = dict(w_raw=w_raw, b_raw=b_raw, w=w, b=b, ws=ws, num_channels=C)

    # Path 1: raw input (C == num_channels) -> conv_raw.
    y = jax.block_until_ready(subject_block_forward(x, subject_idxs, **params))
    y_ref = _subject_block_ref(x, subject_idxs, **params)
    assert y.shape == (B, D1, T)
    assert bool(jnp.allclose(y, y_ref, atol=1e-5, rtol=1e-5))

    # Path 2: already-projected input (C == D1 != num_channels) -> conv.
    x2 = jax.random.normal(k7, (B, D1, T), dtype=jnp.float32)
    y2 = jax.block_until_ready(subject_block_forward(x2, subject_idxs, **params))
    y2_ref = _subject_block_ref(x2, subject_idxs, **params)
    assert bool(jnp.allclose(y2, y2_ref, atol=1e-5, rtol=1e-5))

    # Path 3: larger batch with repeated subjects (exercises subject grouping).
    B3 = 5
    x3 = jax.random.normal(k8, (B3, C, T), dtype=jnp.float32)
    sidx3 = jnp.array([1, 0, 1, 2, 0], dtype=jnp.int32)
    y3 = jax.block_until_ready(subject_block_forward(x3, sidx3, **params))
    y3_ref = _subject_block_ref(x3, sidx3, **params)
    assert bool(jnp.allclose(y3, y3_ref, atol=1e-5, rtol=1e-5))

    print("KERNEL_OK")
</pallas_src>

<mosaic_0001>
module attributes {stable_mosaic.version = 11 : i64} {
  func.func @_subject_block_kernel(%arg0: i32, %arg1: i32, %arg2: memref<2xi32, #tpu.memory_space<smem>>, %arg3: memref<2xi32, #tpu.memory_space<smem>>, %arg4: memref<1x8x128xf32, #tpu.memory_space<vmem>>, %arg5: memref<1x8x8xf32, #tpu.memory_space<vmem>>, %arg6: memref<1x8x1xf32, #tpu.memory_space<vmem>>, %arg7: memref<1x8x128xf32, #tpu.memory_space<vmem>>) attributes {dimension_semantics = [#tpu.dimension_semantics<parallel>, #tpu.dimension_semantics<parallel>], iteration_bounds = array<i64: 2, 1>, scalar_prefetch = 2 : i64, scratch_operands = 0 : i64, tpu.core_type = #tpu.core_type<tc>, window_params = [{transform_indices = @transform_0, window_bounds = array<i64: 1, 8, 128>}, {transform_indices = @transform_1, window_bounds = array<i64: 1, 8, 8>}, {transform_indices = @transform_2, window_bounds = array<i64: 1, 8, 1>}, {transform_indices = @transform_3, window_bounds = array<i64: 1, 8, 128>}]} {
    %c0 = arith.constant 0 : index
    %c0_0 = arith.constant 0 : index
    %c0_1 = arith.constant 0 : index
    %0 = vector.load %arg5[%c0, %c0_0, %c0_1] : memref<1x8x8xf32, #tpu.memory_space<vmem>>, vector<1x8x8xf32>
    %1 = vector.shape_cast %0 : vector<1x8x8xf32> to vector<8x8xf32>
    %c0_2 = arith.constant 0 : index
    %c0_3 = arith.constant 0 : index
    %c0_4 = arith.constant 0 : index
    %2 = vector.load %arg4[%c0_2, %c0_3, %c0_4] : memref<1x8x128xf32, #tpu.memory_space<vmem>>, vector<1x8x128xf32>
    %3 = vector.shape_cast %2 : vector<1x8x128xf32> to vector<8x128xf32>
    %cst = arith.constant dense<0.000000e+00> : vector<8x128xf32>
    %4 = tpu.matmul %1, %3, %cst {dimension_numbers = #tpu.dot_dimension_numbers<[1], [0], [0], [1], [0, 0, 1, 1], [], []>} : vector<8x8xf32>, vector<8x128xf32>, vector<8x128xf32> -> vector<8x128xf32>
    %c0_5 = arith.constant 0 : index
    %c0_6 = arith.constant 0 : index
    %c0_7 = arith.constant 0 : index
    %5 = vector.load %arg6[%c0_5, %c0_6, %c0_7] : memref<1x8x1xf32, #tpu.memory_space<vmem>>, vector<1x8x1xf32>
    %6 = vector.shape_cast %5 : vector<1x8x1xf32> to vector<8x1xf32>
    %7 = vector.broadcast %6 : vector<8x1xf32> to vector<8x128xf32>
    %8 = arith.addf %4, %7 : vector<8x128xf32>
    %c0_8 = arith.constant 0 : index
    %c0_9 = arith.constant 0 : index
    %c0_10 = arith.constant 0 : index
    %9 = vector.load %arg7[%c0_8, %c0_9, %c0_10] : memref<1x8x128xf32, #tpu.memory_space<vmem>>, vector<1x8x128xf32>
    %10 = vector.shape_cast %9 : vector<1x8x128xf32> to vector<8x128xf32>
    %11 = vector.shape_cast %8 : vector<8x128xf32> to vector<1x8x128xf32>
    tpu.vector_store %arg7[%c0_8, %c0_9, %c0_10], %11 {strides = array<i32>} : memref<1x8x128xf32, #tpu.memory_space<vmem>>, vector<1x8x128xf32>,
    return
  }
  func.func @transform_0(%arg0: i32, %arg1: i32, %arg2: memref<2xi32, #tpu.memory_space<smem>>, %arg3: memref<2xi32, #tpu.memory_space<smem>>) -> (i32, i32, i32) {
    %0 = arith.index_cast %arg0 : i32 to index
    %1 = memref.load %arg2[%0] : memref<2xi32, #tpu.memory_space<smem>>
    %c0_i32 = arith.constant 0 : i32
    %c0_i32_0 = arith.constant 0 : i32
    return %1, %c0_i32, %arg1 : i32, i32, i32
  }
  func.func @transform_1(%arg0: i32, %arg1: i32, %arg2: memref<2xi32, #tpu.memory_space<smem>>, %arg3: memref<2xi32, #tpu.memory_space<smem>>) -> (i32, i32, i32) {
    %0 = arith.index_cast %arg0 : i32 to index
    %1 = memref.load %arg3[%0] : memref<2xi32, #tpu.memory_space<smem>>
    %c0_i32 = arith.constant 0 : i32
    %c0_i32_0 = arith.constant 0 : i32
    %c0_i32_1 = arith.constant 0 : i32
    return %1, %c0_i32, %c0_i32_0 : i32, i32, i32
  }
  func.func @transform_2(%arg0: i32, %arg1: i32, %arg2: memref<2xi32, #tpu.memory_space<smem>>, %arg3: memref<2xi32, #tpu.memory_space<smem>>) -> (i32, i32, i32) {
    %0 = arith.index_cast %arg0 : i32 to index
    %1 = memref.load %arg3[%0] : memref<2xi32, #tpu.memory_space<smem>>
    %c0_i32 = arith.constant 0 : i32
    %c0_i32_0 = arith.constant 0 : i32
    %c0_i32_1 = arith.constant 0 : i32
    return %1, %c0_i32, %c0_i32_0 : i32, i32, i32
  }
  func.func @transform_3(%arg0: i32, %arg1: i32, %arg2: memref<2xi32, #tpu.memory_space<smem>>, %arg3: memref<2xi32, #tpu.memory_space<smem>>) -> (i32, i32, i32) {
    %0 = arith.index_cast %arg0 : i32 to index
    %1 = memref.load %arg2[%0] : memref<2xi32, #tpu.memory_space<smem>>
    %c0_i32 = arith.constant 0 : i32
    %c0_i32_0 = arith.constant 0 : i32
    return %1, %c0_i32, %arg1 : i32, i32, i32
  }
}

</mosaic_0001>

<llo_original>
// kernel: tpu_custom_call.1
$region0: #{tpu_custom_call.1}
  #allocation0 [shape = 'u32[]', space=smem, size = 0x4, offset = 0x4, fixed_abs, tag = 'smem constant byte address 0x4 - core index']
  #allocation1 [shape = 'u32[144,128]{1,0:T(1,128)}', space=vmem, size = 0x12000, scoped, tag = 'internal scratch']
  #allocation2 [shape = 's32[1]{0}', space=sflag, size = 0x4, scoped, tag = 'scoped memory for tpu_custom_call.1']
  #allocation3 [shape = 'u8[512]{0}', space=smem, size = 0x200, scoped, tag = 'prefetched SMEM operand 0']
  #allocation4 [shape = 'u8[512]{0}', space=smem, size = 0x200, scoped, tag = 'prefetched SMEM operand 1']
  %s0 = inlined_call_operand.vmem [shape: s32[2], index: 0, kind: input, shape index: {}]
  %s1 = inlined_call_operand.vmem [shape: s32[2], index: 1, kind: input, shape index: {}]
  %s2 = inlined_call_operand.hbm [shape: f32[2,8,128], index: 2, kind: input, shape index: {}]
  %s3 = inlined_call_operand.vmem [shape: f32[3,8,8], index: 3, kind: input, shape index: {}]
  %s4 = inlined_call_operand.vmem [shape: f32[3,8,1], index: 4, kind: input, shape index: {}]
  %s5 = inlined_call_operand.hbm [shape: f32[2,8,128], index: 5, kind: output, shape index: {}]
  %s6 = sld [smem:[#allocation0]]
  $region49: #{tpu_custom_call.1} parent=0
    _
  %s8 = ssub.s32 1, %s6
  %s9 = scalar_select 0, %s8, %s6
  %s10 = sshll.u32 %s0, 4
  %s11 = int_to_ptr.vmem [resolvable:$true] %s10
  %13 = dma.vmem_to_smem %s11, 16, [#allocation3], [#allocation2]
  %s14 = sshll.u32 %s1, 4
  %s15 = int_to_ptr.vmem [resolvable:$true] %s14
  %17 = dma.vmem_to_smem %s15, 16, [#allocation4], [#allocation2]
  %18 = dma.done [#allocation2], 32
  %19 = sfence
  $region1: #{tpu_custom_call.1} parent=0
    #allocation5 [shape = 'u8[8192]{0}', space=vmem, size = 0x2000, scoped, tag = 'input window, operand 2']
    #allocation6 [shape = 's32[2]{0}', space=sflag, size = 0x8, scoped, tag = 'scoped memory for tpu_custom_call.1']
    #allocation7 [shape = 's32[2]{0}', space=sflag, size = 0x8, scoped, tag = 'scoped memory for tpu_custom_call.1']
    #allocation8 [shape = 'u8[8192]{0}', space=vmem, size = 0x2000, scoped, tag = 'output window, operand 0']
    %20 = vsyncpa [#allocation6], 0
    %s21 = scalar_lea.sflag [#allocation6], 1
    %22 = vsyncpa %s21, 0
    %23 = vsyncpa [#allocation7], 0
    %s24 = scalar_lea.sflag [#allocation7], 1
    %25 = vsyncpa %s24, 0
    loop: start=0, step=1, limit=4
    $region2: #{tpu_custom_call.1} parent=1 // loop_pre_header
      _
    $region3: #{tpu_custom_call.1} parent=1 // loop_header
      %s27 = sphi 0, %s31
      %p28 = scmp.ge.s32.totalorder %s27, 4
      %s34 = sphi 0, %s46
      %s35 = sphi 0, %s42
      %s36 = sphi 0, %s34
      %s37 = sphi 0, %s35
      %s38 = sphi 0, %s36
      %s39 = sphi 0, %s37
      %s53 = sphi 0, %s55
      %s56 = sphi 0, %s53
      %s57 = sphi 0, %s56
      %s73 = sphi 0, %s57
      %s81 = sphi 0, %s83
      %s84 = sphi 0, %s81
      %s85 = sphi 0, %s84
      %s101 = sphi 0, %s85
      %s109 = sphi 0, %s111
      %s112 = sphi 0, %s109
      %s113 = sphi 0, %s112
      %s129 = sphi 0, %s113
      %s139 = sphi 0, %s141
      %s142 = sphi 0, %s139
      %s143 = sphi 0, %s142
      %s159 = sphi 0, %s143
    $region4: #{tpu_custom_call.1} parent=1 // loop_header_branch
      %30 = sbr.rel (%p28) target = $region8
    $region5: #{tpu_custom_call.1} parent=1 // loop_body
      %s32 = ssub.s32 %s27, 1
      %s33 = ssub.s32 %s27, 2
      %s40 = sadd.s32 1, %s35
      %p41 = scmp.ge.s32.totalorder %s40, 1
      %s42 = scalar_select %p41, 0, %s40
      %s43 = sadd.s32 1, %s34
      %s44 = scalar_select %p41, %s43, %s34
      %p45 = scmp.ge.s32.totalorder %s44, 2
      %s46 = scalar_select %p45, 0, %s44
      %s47 = sld [smem:[#allocation3 + %s34]]
      %s48 = sld [smem:[#allocation3 + %s46]]
      %s49 = ssub.s32 %s47, %s48
      %s50 = ssub.s32 %s35, %s42
      %s51 = sor.u32 %s49, %s50
      %p52 = scmp.eq.s32.totalorder %s51, 0
      %s54 = sadd.s32 %s53, 1
      %s55 = scalar_select %p52, %s53, %s54
      %p58 = pneg %p52
      %p59 = scmp.eq.s32.totalorder %s27, 1
      %p60 = por %p58, %p59
      %p61 = scmp.ne.s32.totalorder %s53, %s56
      %p62 = scmp.eq.s32.totalorder %s27, 0
      %p63 = por %p61, %p62
      %p64 = scmp.ne.s32.totalorder %s53, %s56
      %p65 = scmp.eq.s32.totalorder %s32, 1
      %p66 = por %p64, %p65
      %p67 = scmp.ne.s32.totalorder %s56, %s57
      %p68 = scmp.eq.s32.totalorder %s32, 0
      %p69 = por %p67, %p68
      %p70 = scmp.ne.s32.totalorder %s56, %s57
      %p71 = scmp.eq.s32.totalorder %s33, 1
      %p72 = por %p70, %p71
      %p74 = scmp.ne.s32.totalorder %s57, %s73
      %p75 = scmp.eq.s32.totalorder %s33, 0
      %p76 = por %p74, %p75
      %s77 = sld [smem:[#allocation4 + %s34]]
      %s78 = sld [smem:[#allocation4 + %s46]]
      %s79 = ssub.s32 %s77, %s78
      %p80 = scmp.eq.s32.totalorder %s79, 0
      %s82 = sadd.s32 %s81, 1
      %s83 = scalar_select %p80, %s81, %s82
      %p86 = pneg %p80
      %p87 = scmp.eq.s32.totalorder %s27, 1
      %p88 = por %p86, %p87
      %p89 = scmp.ne.s32.totalorder %s81, %s84
      %p90 = scmp.eq.s32.totalorder %s27, 0
      %p91 = por %p89, %p90
      %p92 = scmp.ne.s32.totalorder %s81, %s84
      %p93 = scmp.eq.s32.totalorder %s32, 1
      %p94 = por %p92, %p93
      %p95 = scmp.ne.s32.totalorder %s84, %s85
      %p96 = scmp.eq.s32.totalorder %s32, 0
      %p97 = por %p95, %p96
      %p98 = scmp.ne.s32.totalorder %s84, %s85
      %p99 = scmp.eq.s32.totalorder %s33, 1
      %p100 = por %p98, %p99
      %p102 = scmp.ne.s32.totalorder %s85, %s101
      %p103 = scmp.eq.s32.totalorder %s33, 0
      %p104 = por %p102, %p103
      %s105 = sld [smem:[#allocation4 + %s34]]
      %s106 = sld [smem:[#allocation4 + %s46]]
      %s107 = ssub.s32 %s105, %s106
      %p108 = scmp.eq.s32.totalorder %s107, 0
      %s110 = sadd.s32 %s109, 1
      %s111 = scalar_select %p108, %s109, %s110
      %p114 = pneg %p108
      %p115 = scmp.eq.s32.totalorder %s27, 1
      %p116 = por %p114, %p115
      %p117 = scmp.ne.s32.totalorder %s109, %s112
      %p118 = scmp.eq.s32.totalorder %s27, 0
      %p119 = por %p117, %p118
      %p120 = scmp.ne.s32.totalorder %s109, %s112
      %p121 = scmp.eq.s32.totalorder %s32, 1
      %p122 = por %p120, %p121
      %p123 = scmp.ne.s32.totalorder %s112, %s113
      %p124 = scmp.eq.s32.totalorder %s32, 0
      %p125 = por %p123, %p124
      %p126 = scmp.ne.s32.totalorder %s112, %s113
      %p127 = scmp.eq.s32.totalorder %s33, 1
      %p128 = por %p126, %p127
      %p130 = scmp.ne.s32.totalorder %s113, %s129
      %p131 = scmp.eq.s32.totalorder %s33, 0
      %p132 = por %p130, %p131
      %s133 = sld [smem:[#allocation3 + %s34]]
      %s134 = sld [smem:[#allocation3 + %s46]]
      %s135 = ssub.s32 %s133, %s134
      %s136 = ssub.s32 %s35, %s42
      %s137 = sor.u32 %s135, %s136
      %p138 = scmp.eq.s32.totalorder %s137, 0
      %s140 = sadd.s32 %s139, 1
      %s141 = scalar_select %p138, %s139, %s140
      %p144 = pneg %p138
      %p145 = scmp.eq.s32.totalorder %s27, 1
      %p146 = por %p144, %p145
      %p147 = scmp.ne.s32.totalorder %s139, %s142
      %p148 = scmp.eq.s32.totalorder %s27, 0
      %p149 = por %p147, %p148
      %p150 = scmp.ne.s32.totalorder %s139, %s142
      %p151 = scmp.eq.s32.totalorder %s32, 1
      %p152 = por %p150, %p151
      %p153 = scmp.ne.s32.totalorder %s142, %s143
      %p154 = scmp.eq.s32.totalorder %s32, 0
      %p155 = por %p153, %p154
      %p156 = scmp.ne.s32.totalorder %s142, %s143
      %p157 = scmp.eq.s32.totalorder %s33, 1
      %p158 = por %p156, %p157
      %p160 = scmp.ne.s32.totalorder %s143, %s159
      %p161 = scmp.eq.s32.totalorder %s33, 0
      %p162 = por %p160, %p161
      %p163 = scmp.le.s32.totalorder 1, %s27
      %p164 = scmp.lt.s32.totalorder %s27, 3
      %p165 = pnand %p163, %p164
      %p166 = pneg %p165
      // Predicated region
      $region9: #{tpu_custom_call.1} parent=5 // pred_check
        _
      $region10: #{tpu_custom_call.1} parent=5 // pred_check_branch
        %168 = sbr.rel (%p165) target = $region12
      $region11: #{tpu_custom_call.1} parent=5 // pred_region
        %s169 = ssub.s32 %s27, 1
      $region12: #{tpu_custom_call.1} parent=5 // pred_fallthru
        _
      %p170 = scmp.lt.s32.totalorder %s27, 2
      // Predicated region
      $region13: #{tpu_custom_call.1} parent=5 // pred_check
        %p171 = pneg %p170
      $region14: #{tpu_custom_call.1} parent=5 // pred_check_branch
        %173 = sbr.rel (%p171) target = $region16
      $region15: #{tpu_custom_call.1} parent=5 // pred_region
        // Predicated region
        $region17: #{tpu_custom_call.1} parent=15 // pred_check
          %p174 = pneg %p63
        $region18: #{tpu_custom_call.1} parent=15 // pred_check_branch
          %176 = sbr.rel (%p174) target = $region20
        $region19: #{tpu_custom_call.1} parent=15 // pred_region
          %s177 = sand.u32 %s53, 1
          %s178 = scalar_lea.sflag [#allocation6], %s177
          %s179 = sand.u32 %s53, 1
          %s180 = smul.addr %s179, 8
          %s181 = scalar_lea.vmem [#allocation5], %s180
          %s182 = sld [smem:[#allocation3 + %s34]]
          %s184 = ssub.s32 128, 128
          %185 = vsyncadd %s178, %s184
          %s186 = sadd.s32 %s35, %s182
          %s187 = smul.addr %s186, 128
          %s188 = scalar_lea.hbm %s2, %s187
          %s190 = sshll.u32 %s181, 4
          %s191 = int_to_ptr.vmem [resolvable:$true] %s190
          %193 = dma.hbm_to_vmem [thread:$0]  %s188, 128, %s191, %s178
        $region20: #{tpu_custom_call.1} parent=15 // pred_fallthru
          _
        // Predicated region
        $region21: #{tpu_custom_call.1} parent=15 // pred_check
          %p194 = pneg %p91
        $region22: #{tpu_custom_call.1} parent=15 // pred_check_branch
          %196 = sbr.rel (%p194) target = $region24
        $region23: #{tpu_custom_call.1} parent=15 // pred_region
          %s197 = sld [smem:[#allocation4 + %s34]]
          %p198 = scmp.lt.s32.totalorder %s197, 2
          %s199 = scalar_select %p198, %s197, 2
          %s200 = smul.addr %s199, 8
          %s201 = scalar_lea.vmem %s3, %s200
          %s202 = sld [smem:[#allocation4 + %s34]]
        $region24: #{tpu_custom_call.1} parent=15 // pred_fallthru
          _
        // Predicated region
        $region25: #{tpu_custom_call.1} parent=15 // pred_check
          %p203 = pneg %p119
        $region26: #{tpu_custom_call.1} parent=15 // pred_check_branch
          %205 = sbr.rel (%p203) target = $region28
        $region27: #{tpu_custom_call.1} parent=15 // pred_region
          %s206 = sld [smem:[#allocation4 + %s34]]
          %p207 = scmp.lt.s32.totalorder %s206, 2
          %s208 = scalar_select %p207, %s206, 2
          %s209 = smul.addr %s208, 8
          %s210 = scalar_lea.vmem %s4, %s209
          %s211 = sld [smem:[#allocation4 + %s34]]
        $region28: #{tpu_custom_call.1} parent=15 // pred_fallthru
          _
      $region16: #{tpu_custom_call.1} parent=5 // pred_fallthru
        _
      %p212 = scmp.le.s32.totalorder 1, %s27
      %p213 = scmp.lt.s32.totalorder %s27, 3
      %p214 = pnand %p212, %p213
      %p215 = pneg %p214
      // Predicated region
      $region29: #{tpu_custom_call.1} parent=5 // pred_check
        _
      $region30: #{tpu_custom_call.1} parent=5 // pred_check_branch
        %217 = sbr.rel (%p214) target = $region32
      $region31: #{tpu_custom_call.1} parent=5 // pred_region
        %s218 = ssub.s32 %s27, 1
        %s219 = sand.u32 %s56, 1
        %s220 = scalar_lea.sflag [#allocation6], %s219
        %s221 = sand.u32 %s56, 1
        %s222 = smul.addr %s221, 8
        %s223 = scalar_lea.vmem [#allocation5], %s222
        // Predicated region
        $region33: #{tpu_custom_call.1} parent=31 // pred_check
          %p224 = pneg %p69
        $region34: #{tpu_custom_call.1} parent=31 // pred_check_branch
          %226 = sbr.rel (%p224) target = $region36
        $region35: #{tpu_custom_call.1} parent=31 // pred_region
          %227 = dma.done %s220, 128
        $region36: #{tpu_custom_call.1} parent=31 // pred_fallthru
          _
        %s228 = sand.u32 %s56, 1
        %s229 = scalar_lea.sflag [#allocation6], %s228
        %s230 = sand.u32 %s56, 1
        %s231 = smul.addr %s230, 8
        %s232 = scalar_lea.vmem [#allocation5], %s231
        %p233 = pneg %p69
        %p234 = pneg %p66
        %s235 = sld [smem:[#allocation4 + %s36]]
        %p236 = scmp.lt.s32.totalorder %s235, 2
        %s237 = scalar_select %p236, %s235, 2
        %s238 = smul.addr %s237, 8
        %s239 = scalar_lea.vmem %s3, %s238
        %p240 = pneg %p97
        %p241 = pneg %p94
        %s242 = sld [smem:[#allocation4 + %s36]]
        %p243 = scmp.lt.s32.totalorder %s242, 2
        %s244 = scalar_select %p243, %s242, 2
        %s245 = smul.addr %s244, 8
        %s246 = scalar_lea.vmem %s4, %s245
        %p247 = pneg %p125
        %p248 = pneg %p122
        %p249 = pneg %p155
        %p250 = pneg %p152
        %s251 = sand.u32 %s142, 1
        %s252 = scalar_lea.sflag [#allocation7], %s251
        %s253 = sand.u32 %s142, 1
        %s254 = smul.addr %s253, 8
        %s255 = scalar_lea.vmem [#allocation8], %s254
        %s256 = sld [smem:[#allocation3 + %s36]]
        %s257 = sld [smem:[#allocation4 + %s36]]
        %p258 = scmp.lt.s32.totalorder %s257, 2
        %s259 = scalar_select %p258, %s257, 2
        %s260 = smul.addr %s259, 8
        %s261 = scalar_lea.vmem %s3, %s260
        %s262 = sld [smem:[#allocation4 + %s36]]
        %s263 = sld [smem:[#allocation4 + %s36]]
        %p264 = scmp.lt.s32.totalorder %s263, 2
        %s265 = scalar_select %p264, %s263, 2
        %s266 = smul.addr %s265, 8
        %s267 = scalar_lea.vmem %s4, %s266
        %s268 = sld [smem:[#allocation4 + %s36]]
        %s269 = sld [smem:[#allocation3 + %s36]]
        %v270 = vld [vmem:[%s261] sm:$0xff]
        %v271 = vld [vmem:[%s223] sm:$0xff]
        %v272 = vld [vmem:[%s267] sm:$0xff]
        %274 = vset.pattern.permute.xlu0 0
        %275 = vperm.xlu0 %274, %v272
        %v276 = vpop.permute.xlu0 %275
        %vm278 = vcmask 64512
        %v280 = vsel %vm278, %v270, 0
        %282 = vmatprep.subr.mxu0 0.0
        %283 = vmatpush1.msra.mxu0 0.0
        %284 = vmatprep.subr.mxu0 0.0
        %285 = vmatpush1.msra.mxu0 0.0
        %286 = vmatprep.subr.mxu0 0.0
        %287 = vmatpush1.msra.mxu0 0.0
        %288 = vmatprep.subr.mxu0 0.0
        %289 = vmatpush1.msra.mxu0 0.0
        %290 = vmatprep.subr.mxu0 0.0
        %291 = vmatpush1.msra.mxu0 0.0
        %292 = vmatprep.subr.mxu0 0.0
        %293 = vmatpush1.msra.mxu0 0.0
        %294 = vmatprep.subr.mxu0 0.0
        %295 = vmatpush1.msra.mxu0 0.0
        %296 = vmatprep.subr.mxu0 0.0
        %297 = vmatpush1.msra.mxu0 0.0
        %298 = vmatprep.subr.mxu0 0.0
        %299 = vmatpush1.msra.mxu0 0.0
        %300 = vmatprep.subr.mxu0 0.0
        %301 = vmatpush1.msra.mxu0 0.0
        %302 = vmatprep.subr.mxu0 0.0
        %303 = vmatpush1.msra.mxu0 0.0
        %304 = vmatprep.subr.mxu0 0.0
        %305 = vmatpush1.msra.mxu0 0.0
        %306 = vmatprep.subr.mxu0 0.0
        %307 = vmatpush1.msra.mxu0 0.0
        %308 = vmatprep.subr.mxu0 0.0
        %309 = vmatpush1.msra.mxu0 0.0
        %310 = vmatprep.subr.mxu0 0.0
        %311 = vmatpush1.msra.mxu0 0.0
        %312 = vmatprep.subr.mxu0 0.0
        %313 = vmatpush1.msra.mxu0 %v271
        %314 = vmatprep.subr.mxu0 0.0
        %315 = vmatpush2.msra.mxu0 0.0
        %316 = vmatprep.subr.mxu0 0.0
        %317 = vmatpush2.msra.mxu0 0.0
        %318 = vmatprep.subr.mxu0 0.0
        %319 = vmatpush2.msra.mxu0 0.0
        %320 = vmatprep.subr.mxu0 0.0
        %321 = vmatpush2.msra.mxu0 0.0
        %322 = vmatprep.subr.mxu0 0.0
        %323 = vmatpush2.msra.mxu0 0.0
        %324 = vmatprep.subr.mxu0 0.0
        %325 = vmatpush2.msra.mxu0 0.0
        %326 = vmatprep.subr.mxu0 0.0
        %327 = vmatpush2.msra.mxu0 0.0
        %328 = vmatprep.subr.mxu0 0.0
        %329 = vmatpush2.msra.mxu0 0.0
        %330 = vmatprep.subr.mxu0 0.0
        %331 = vmatpush2.msra.mxu0 0.0
        %332 = vmatprep.subr.mxu0 0.0
        %333 = vmatpush2.msra.mxu0 0.0
        %334 = vmatprep.subr.mxu0 0.0
        %335 = vmatpush2.msra.mxu0 0.0
        %336 = vmatprep.subr.mxu0 0.0
        %337 = vmatpush2.msra.mxu0 0.0
        %338 = vmatprep.subr.mxu0 0.0
        %339 = vmatpush2.msra.mxu0 0.0
        %340 = vmatprep.subr.mxu0 0.0
        %341 = vmatpush2.msra.mxu0 0.0
        %342 = vmatprep.subr.mxu0 0.0
        %343 = vmatpush2.msra.mxu0 0.0
        %344 = vmatprep.subr.mxu0 0.0
        %345 = vmatpush2.msra.mxu0 0.0
        %346 = vmatprep.mubr.f32.mxu0 0.0
        %347 = vmatmul.mubr.f32.gmra.mxu0 %v280
        %v348 = vpop.f32.mrf.mxu0
        %v349 = vadd.f32 %v276, %v348
        %v350 = vpop.f32.mrf.mxu0
        %351 = vdwg.mxu0
        %352 = vst [vmem:[%s255] sm:$0xff] %v349
        %s353 = sand.u32 %s142, 1
        %s354 = scalar_lea.sflag [#allocation7], %s353
        %s355 = sand.u32 %s142, 1
        %s356 = smul.addr %s355, 8
        %s357 = scalar_lea.vmem [#allocation8], %s356
        // Predicated region
        $region37: #{tpu_custom_call.1} parent=31 // pred_check
          %p358 = pneg %p152
        $region38: #{tpu_custom_call.1} parent=31 // pred_check_branch
          %360 = sbr.rel (%p358) target = $region40
        $region39: #{tpu_custom_call.1} parent=31 // pred_region
          %s361 = sld [smem:[#allocation3 + %s36]]
          %s363 = ssub.s32 128, 128
          %364 = vsyncadd %s354, %s363
          %s365 = sadd.s32 %s37, %s361
          %s366 = smul.addr %s365, 128
          %s367 = scalar_lea.hbm %s5, %s366
          %s369 = sshll.u32 %s357, 4
          %s370 = int_to_ptr.vmem [resolvable:$true] %s369
          %372 = dma.vmem_to_hbm [thread:$0]  %s370, 128, %s367, %s354
        $region40: #{tpu_custom_call.1} parent=31 // pred_fallthru
          _
      $region32: #{tpu_custom_call.1} parent=5 // pred_fallthru
        _
      %p373 = scmp.le.s32.totalorder 2, %s27
      // Predicated region
      $region41: #{tpu_custom_call.1} parent=5 // pred_check
        %p374 = pneg %p373
      $region42: #{tpu_custom_call.1} parent=5 // pred_check_branch
        %376 = sbr.rel (%p374) target = $region44
      $region43: #{tpu_custom_call.1} parent=5 // pred_region
        %s377 = ssub.s32 %s27, 2
        // Predicated region
        $region45: #{tpu_custom_call.1} parent=43 // pred_check
          %p378 = pneg %p158
        $region46: #{tpu_custom_call.1} parent=43 // pred_check_branch
          %380 = sbr.rel (%p378) target = $region48
        $region47: #{tpu_custom_call.1} parent=43 // pred_region
          %s381 = sand.u32 %s143, 1
          %s382 = scalar_lea.sflag [#allocation7], %s381
          %s383 = sand.u32 %s143, 1
          %s384 = smul.addr %s383, 8
          %s385 = scalar_lea.vmem [#allocation8], %s384
          %386 = dma.done %s382, 128
        $region48: #{tpu_custom_call.1} parent=43 // pred_fallthru
          _
      $region44: #{tpu_custom_call.1} parent=5 // pred_fallthru
        _
    $region6: #{tpu_custom_call.1} parent=1 // loop_footer
      %s31 = sadd.s32 1, %s27
    $region7: #{tpu_custom_call.1} parent=1 // loop_footer_branch
      %26 = sbr.rel target = $region3
    $region8: #{tpu_custom_call.1} parent=1 // loop_exit
      _
    %387 = vsyncpa [#allocation6], 1
    %s388 = scalar_lea.sflag [#allocation6], 1
    %389 = vsyncpa %s388, 1
    %390 = vsyncpa [#allocation7], 1
    %s391 = scalar_lea.sflag [#allocation7], 1
    %392 = vsyncpa %s391, 1

</llo_original>
